<compile_context>
chip_gen: v7x
topology: tpu7x:2x2x1
jax: 0.10.0
libtpu: 0.0.40
codegen_flags: <defaults>
</compile_context>

<pallas_src>
import functools

import jax
import jax.numpy as jnp
from jax import lax
from jax.experimental import pallas as pl
from jax.experimental.pallas import tpu as pltpu

_BN_EPS = 1e-5


# ----------------------------------------------------------------------------
# Fused kernel: Linear1 + BatchNorm1d (batch stats) + ReLU + Linear2
# ----------------------------------------------------------------------------
def _fused_predictor_kernel(x_ref, w1_ref, gamma_ref, beta_ref, w2_ref, b2_ref,
                            o_ref, h_scr, psum_scr, psumsq_scr, st_scr,
                            *, inv_batch, eps):
    phase = pl.program_id(0)
    j = pl.program_id(1)

    # ---------------- phase 0: Linear1 + BN partial statistics ---------------
    @pl.when(phase == 0)
    def _():
        # bf16 operands into the MXU (cast in-kernel, under the matmul),
        # f32 accumulation.
        h = jnp.dot(x_ref[...].astype(jnp.bfloat16),
                    w1_ref[...].astype(jnp.bfloat16),
                    preferred_element_type=jnp.float32)
        # NOTE: layer-1 bias intentionally omitted -- a per-feature constant
        # shift cancels exactly under training-mode BatchNorm.
        h_scr[j] = h                               # persistent VMEM, no HBM

        @pl.when(j == 0)
        def _():
            psum_scr[...] = jnp.zeros_like(psum_scr)
            psumsq_scr[...] = jnp.zeros_like(psumsq_scr)

        # One pass over h: sum and sum-of-squares, f32 running accumulators.
        psum_scr[...] += jnp.sum(h, axis=0, keepdims=True)
        psumsq_scr[...] += jnp.sum(h * h, axis=0, keepdims=True)

    # ------------- phase 1: fold BN, then BN + ReLU + Linear2 per tile -------
    @pl.when(phase == 1)
    def _():
        @pl.when(j == 0)
        def _():
            mean = psum_scr[...] * inv_batch
            # Biased variance (PyTorch BN normalization). mean stays small
            # because b1 is not added; clamp guards f32 cancellation.
            var = jnp.maximum(psumsq_scr[...] * inv_batch - mean * mean, 0.0)
            s = gamma_ref[...] * lax.rsqrt(var + eps)
            t = beta_ref[...] - mean * s
            st_scr[0:1, :] = s
            st_scr[1:2, :] = t

        h = h_scr[j]
        # Folded BN = single FMA per element, then ReLU.
        hn = jnp.maximum(h * st_scr[0:1, :] + st_scr[1:2, :], 0.0)
        out = jnp.dot(hn.astype(jnp.bfloat16),
                      w2_ref[...].astype(jnp.bfloat16),
                      preferred_element_type=jnp.float32)
        o_ref[...] = (out + b2_ref[...]).astype(o_ref.dtype)


# ----------------------------------------------------------------------------
# Wrapper
# ----------------------------------------------------------------------------
def _pick_tile(b, preferred=512):
    # Prefer large, MXU-friendly batch tiles; fall back to whatever divides B.
    for t in (preferred, 256, 128, 64, 32, 16, 8):
        if t <= b and b % t == 0:
            return t
    return b


def _fused_vmem_bytes(B, in_dim, hidden, out_dim, tile_b):
    f32 = 4
    # Streamed blocks are double-buffered by the pipeline; count resident
    # blocks twice as well to stay conservative.
    stream = 2 * (tile_b * in_dim + tile_b * out_dim) * f32
    resident = 2 * (in_dim * hidden + 2 * hidden + hidden * out_dim + out_dim) * f32
    scratch = (B * hidden + 4 * hidden) * f32
    return stream + resident + scratch


def prediction_mlp_forward(x, params, *, tile_b=None, eps=_BN_EPS):
    """x: (B, in_dim) float32. params: dict of w1, b1, gamma, beta, w2, b2."""
    B, in_dim = x.shape
    hidden = params["w1"].shape[1]
    out_dim = params["w2"].shape[1]

    tile_b = tile_b if tile_b is not None else _pick_tile(B)
    assert B % tile_b == 0, "batch must be divisible by the batch tile"
    # TODO(synk): ragged batches (B % tile_b != 0) need a count-aware masked
    # final tile; zero-padding would corrupt the BatchNorm statistics.
    n_tiles = B // tile_b

    vmem_bytes = _fused_vmem_bytes(B, in_dim, hidden, out_dim, tile_b)
    # TODO(synk): when B*hidden is too large for the VMEM-resident h scratch
    # (~48 MiB usable/core on v7x, ~100 MiB on v5e/v6e), fall back to a
    # two-pass variant that spills h to HBM as bf16 and keeps the batch grid
    # "parallel" for megacore.
    assert vmem_bytes <= 100 * 1024 * 1024, (
        f"fused predictor needs ~{vmem_bytes / 2**20:.1f} MiB VMEM; "
        "shapes this large need the two-pass fallback")
    vmem_limit = min(int(vmem_bytes * 1.25) + (2 << 20), 110 * 1024 * 1024)

    kernel = functools.partial(_fused_predictor_kernel,
                               inv_batch=1.0 / B, eps=eps)

    out = pl.pallas_call(
        kernel,
        out_shape=jax.ShapeDtypeStruct((B, out_dim), x.dtype),
        grid_spec=pltpu.PrefetchScalarGridSpec(
            num_scalar_prefetch=0,
            grid=(2, n_tiles),                       # (phase, batch tile)
            in_specs=[
                # x: stream tile j in phase 0; pin to the last block in
                # phase 1 so no new DMAs are issued after the phase switch.
                pl.BlockSpec(
                    (tile_b, in_dim),
                    lambda p, j: (j * (1 - p) + (n_tiles - 1) * p, 0)),
                pl.BlockSpec((in_dim, hidden), lambda p, j: (0, 0)),   # w1
                pl.BlockSpec((1, hidden), lambda p, j: (0, 0)),        # gamma
                pl.BlockSpec((1, hidden), lambda p, j: (0, 0)),        # beta
                pl.BlockSpec((hidden, out_dim), lambda p, j: (0, 0)),  # w2
                pl.BlockSpec((1, out_dim), lambda p, j: (0, 0)),       # b2
            ],
            # out: block j written in phase 1; pinned at block 0 during
            # phase 0 (never written there, so nothing spurious reaches HBM).
            out_specs=pl.BlockSpec((tile_b, out_dim), lambda p, j: (j * p, 0)),
            scratch_shapes=[
                pltpu.VMEM((n_tiles, tile_b, hidden), jnp.float32),  # h (persists)
                pltpu.VMEM((1, hidden), jnp.float32),                # running sum
                pltpu.VMEM((1, hidden), jnp.float32),                # running sumsq
                pltpu.VMEM((2, hidden), jnp.float32),                # folded s, t
            ],
        ),
        compiler_params=pltpu.CompilerParams(
            # BatchNorm couples all batch tiles through the shared stats
            # scratch, and phase 1 depends on all of phase 0 -> sequential.
            dimension_semantics=("arbitrary", "arbitrary"),
            vmem_limit_bytes=vmem_limit,
        ),
    )(x, params["w1"], params["gamma"], params["beta"],
      params["w2"], params["b2"])

    return out


# ----------------------------------------------------------------------------
# Parameters & references
# ----------------------------------------------------------------------------
def init_params(key, in_dim, hidden_dim, out_dim):
    """PyTorch-default-style init: Linear U(-1/sqrt(fan_in), 1/sqrt(fan_in)),
    BatchNorm1d gamma=1, beta=0. Weights stored as (in_features, out_features)."""
    k1, k2, k3, k4 = jax.random.split(key, 4)
    bound1 = 1.0 / jnp.sqrt(in_dim)
    bound2 = 1.0 / jnp.sqrt(hidden_dim)
    return {
        "w1": jax.random.uniform(k1, (in_dim, hidden_dim), jnp.float32,
                                 -bound1, bound1),
        # Kept for interface fidelity; has zero effect on the output under
        # training-mode BatchNorm, so the kernel skips it.
        "b1": jax.random.uniform(k2, (1, hidden_dim), jnp.float32,
                                 -bound1, bound1),
        "gamma": jnp.ones((1, hidden_dim), jnp.float32),
        "beta": jnp.zeros((1, hidden_dim), jnp.float32),
        "w2": jax.random.uniform(k3, (hidden_dim, out_dim), jnp.float32,
                                 -bound2, bound2),
        "b2": jax.random.uniform(k4, (1, out_dim), jnp.float32,
                                 -bound2, bound2),
    }


def _reference_forward_f32(x, params, eps=_BN_EPS):
    """Pure-f32 JAX reference (PyTorch training-mode semantics, WITH b1)."""
    h = x @ params["w1"] + params["b1"]
    mean = jnp.mean(h, axis=0, keepdims=True)
    var = jnp.mean((h - mean) ** 2, axis=0, keepdims=True)
    h = (h - mean) / jnp.sqrt(var + eps)
    h = h * params["gamma"] + params["beta"]
    h = jnp.maximum(h, 0.0)
    return h @ params["w2"] + params["b2"]


def _reference_forward_mixed(x, params, eps=_BN_EPS):
    """JAX reference mirroring the kernel's exact math path
    (bf16 MXU operands, f32 accumulation, b1 dropped, folded BN)."""
    bf = jnp.bfloat16
    h = jnp.dot(x.astype(bf), params["w1"].astype(bf),
                preferred_element_type=jnp.float32)
    mean = jnp.mean(h, axis=0, keepdims=True)
    var = jnp.maximum(jnp.mean(h * h, axis=0, keepdims=True) - mean * mean, 0.0)
    s = params["gamma"] * lax.rsqrt(var + eps)
    t = params["beta"] - mean * s
    hn = jnp.maximum(h * s + t, 0.0)
    return jnp.dot(hn.astype(bf), params["w2"].astype(bf),
                   preferred_element_type=jnp.float32) + params["b2"]


if __name__ == "__main__":
    # Small but lane-dense shapes (feature dims multiples of 128); tile_b=32
    # gives a 2-tile grid so the cross-tile BN stats and the two-phase logic
    # are both exercised.
    B, in_dim, hidden_dim, out_dim = 64, 256, 256, 128

    key = jax.random.PRNGKey(0)
    kx, kp = jax.random.split(key)
    x = jax.random.normal(kx, (B, in_dim), jnp.float32)
    params = init_params(kp, in_dim, hidden_dim, out_dim)

    out = prediction_mlp_forward(x, params, tile_b=32)
    out = jax.block_until_ready(out)
    assert out.shape == (B, out_dim)

    # Tight check against a reference following the same mixed-precision path.
    ref_mixed = _reference_forward_mixed(x, params)
    assert jnp.allclose(out, ref_mixed, atol=5e-3, rtol=5e-3), \
        "mismatch vs mixed-precision JAX reference"

    # Looser check against the pure-f32 PyTorch-semantics reference (with b1);
    # the only differences are bf16 matmul-operand rounding and the (exactly
    # cancelling) b1 term.
    ref_f32 = _reference_forward_f32(x, params)
    assert jnp.allclose(out, ref_f32, atol=5e-2, rtol=5e-2), \
        "mismatch vs f32 JAX reference"

    print("KERNEL_OK")
</pallas_src>

<mosaic_0001>
module attributes {stable_mosaic.version = 11 : i64} {
  func.func @_fused_predictor_kernel(%arg0: i32, %arg1: i32, %arg2: memref<32x256xf32, #tpu.memory_space<vmem>>, %arg3: memref<256x256xf32, #tpu.memory_space<vmem>>, %arg4: memref<1x256xf32, #tpu.memory_space<vmem>>, %arg5: memref<1x256xf32, #tpu.memory_space<vmem>>, %arg6: memref<256x128xf32, #tpu.memory_space<vmem>>, %arg7: memref<1x128xf32, #tpu.memory_space<vmem>>, %arg8: memref<32x128xf32, #tpu.memory_space<vmem>>, %arg9: memref<2x32x256xf32, #tpu.memory_space<vmem>>, %arg10: memref<1x256xf32, #tpu.memory_space<vmem>>, %arg11: memref<1x256xf32, #tpu.memory_space<vmem>>, %arg12: memref<2x256xf32, #tpu.memory_space<vmem>>) attributes {dimension_semantics = [#tpu.dimension_semantics<arbitrary>, #tpu.dimension_semantics<arbitrary>], iteration_bounds = array<i64: 2, 2>, scalar_prefetch = 0 : i64, scratch_operands = 4 : i64, tpu.core_type = #tpu.core_type<tc>, window_params = [{transform_indices = @transform_0, window_bounds = array<i64: 32, 256>}, {pipeline_mode = #tpu.pipeline_mode<synchronous>, transform_indices = @transform_1, window_bounds = array<i64: 256, 256>}, {pipeline_mode = #tpu.pipeline_mode<synchronous>, transform_indices = @transform_2, window_bounds = array<i64: 1, 256>}, {pipeline_mode = #tpu.pipeline_mode<synchronous>, transform_indices = @transform_3, window_bounds = array<i64: 1, 256>}, {pipeline_mode = #tpu.pipeline_mode<synchronous>, transform_indices = @transform_4, window_bounds = array<i64: 256, 128>}, {pipeline_mode = #tpu.pipeline_mode<synchronous>, transform_indices = @transform_5, window_bounds = array<i64: 1, 128>}, {transform_indices = @transform_6, window_bounds = array<i64: 32, 128>}]} {
    %c0_i32 = arith.constant 0 : i32
    %0 = arith.cmpi eq, %arg0, %c0_i32 : i32
    %1 = arith.extui %0 : i1 to i32
    %c0_i32_0 = arith.constant 0 : i32
    %2 = arith.cmpi ne, %1, %c0_i32_0 : i32
    scf.if %2 {
      %c0 = arith.constant 0 : index
      %c0_2 = arith.constant 0 : index
      %6 = vector.load %arg2[%c0, %c0_2] : memref<32x256xf32, #tpu.memory_space<vmem>>, vector<32x256xf32>
      %7 = arith.truncf %6 : vector<32x256xf32> to vector<32x256xbf16>
      %c0_3 = arith.constant 0 : index
      %c0_4 = arith.constant 0 : index
      %8 = vector.load %arg3[%c0_3, %c0_4] : memref<256x256xf32, #tpu.memory_space<vmem>>, vector<256x256xf32>
      %9 = arith.truncf %8 : vector<256x256xf32> to vector<256x256xbf16>
      %cst = arith.constant dense<0.000000e+00> : vector<32x256xf32>
      %10 = tpu.matmul %7, %9, %cst {dimension_numbers = #tpu.dot_dimension_numbers<[1], [0], [0], [1], [0, 0, 1, 1], [], []>} : vector<32x256xbf16>, vector<256x256xbf16>, vector<32x256xf32> -> vector<32x256xf32>
      %11 = arith.index_cast %arg1 : i32 to index
      %c0_5 = arith.constant 0 : index
      %c0_6 = arith.constant 0 : index
      %12 = vector.load %arg9[%11, %c0_5, %c0_6] : memref<2x32x256xf32, #tpu.memory_space<vmem>>, vector<1x32x256xf32>
      %13 = vector.shape_cast %12 : vector<1x32x256xf32> to vector<32x256xf32>
      %14 = vector.shape_cast %10 : vector<32x256xf32> to vector<1x32x256xf32>
      tpu.vector_store %arg9[%11, %c0_5, %c0_6], %14 {strides = array<i32>} : memref<2x32x256xf32, #tpu.memory_space<vmem>>, vector<1x32x256xf32>,
      %c0_i32_7 = arith.constant 0 : i32
      %15 = arith.cmpi eq, %arg1, %c0_i32_7 : i32
      %16 = arith.extui %15 : i1 to i32
      %c0_i32_8 = arith.constant 0 : i32
      %17 = arith.cmpi ne, %16, %c0_i32_8 : i32
      scf.if %17 {
        %cst_19 = arith.constant 0.000000e+00 : f32
        %29 = vector.broadcast %cst_19 : f32 to vector<1x256xf32>
        %c0_20 = arith.constant 0 : index
        %c0_21 = arith.constant 0 : index
        %30 = vector.load %arg10[%c0_20, %c0_21] : memref<1x256xf32, #tpu.memory_space<vmem>>, vector<1x256xf32>
        tpu.vector_store %arg10[%c0_20, %c0_21], %29 {strides = array<i32>} : memref<1x256xf32, #tpu.memory_space<vmem>>, vector<1x256xf32>,
        %cst_22 = arith.constant 0.000000e+00 : f32
        %31 = vector.broadcast %cst_22 : f32 to vector<1x256xf32>
        %c0_23 = arith.constant 0 : index
        %c0_24 = arith.constant 0 : index
        %32 = vector.load %arg11[%c0_23, %c0_24] : memref<1x256xf32, #tpu.memory_space<vmem>>, vector<1x256xf32>
        tpu.vector_store %arg11[%c0_23, %c0_24], %31 {strides = array<i32>} : memref<1x256xf32, #tpu.memory_space<vmem>>, vector<1x256xf32>,
      } else {
      }
      %c0_9 = arith.constant 0 : index
      %c0_10 = arith.constant 0 : index
      %18 = vector.load %arg10[%c0_9, %c0_10] : memref<1x256xf32, #tpu.memory_space<vmem>>, vector<1x256xf32>
      %cst_11 = arith.constant dense<0.000000e+00> : vector<256xf32>
      %19 = vector.multi_reduction <add>, %10, %cst_11 [0] : vector<32x256xf32> to vector<256xf32>
      %20 = vector.shape_cast %19 : vector<256xf32> to vector<1x256xf32>
      %21 = arith.addf %18, %20 : vector<1x256xf32>
      %c0_12 = arith.constant 0 : index
      %c0_13 = arith.constant 0 : index
      %22 = vector.load %arg10[%c0_12, %c0_13] : memref<1x256xf32, #tpu.memory_space<vmem>>, vector<1x256xf32>
      tpu.vector_store %arg10[%c0_12, %c0_13], %21 {strides = array<i32>} : memref<1x256xf32, #tpu.memory_space<vmem>>, vector<1x256xf32>,
      %c0_14 = arith.constant 0 : index
      %c0_15 = arith.constant 0 : index
      %23 = vector.load %arg11[%c0_14, %c0_15] : memref<1x256xf32, #tpu.memory_space<vmem>>, vector<1x256xf32>
      %24 = arith.mulf %10, %10 : vector<32x256xf32>
      %cst_16 = arith.constant dense<0.000000e+00> : vector<256xf32>
      %25 = vector.multi_reduction <add>, %24, %cst_16 [0] : vector<32x256xf32> to vector<256xf32>
      %26 = vector.shape_cast %25 : vector<256xf32> to vector<1x256xf32>
      %27 = arith.addf %23, %26 : vector<1x256xf32>
      %c0_17 = arith.constant 0 : index
      %c0_18 = arith.constant 0 : index
      %28 = vector.load %arg11[%c0_17, %c0_18] : memref<1x256xf32, #tpu.memory_space<vmem>>, vector<1x256xf32>
      tpu.vector_store %arg11[%c0_17, %c0_18], %27 {strides = array<i32>} : memref<1x256xf32, #tpu.memory_space<vmem>>, vector<1x256xf32>,
    } else {
    }
    %c1_i32 = arith.constant 1 : i32
    %3 = arith.cmpi eq, %arg0, %c1_i32 : i32
    %4 = arith.extui %3 : i1 to i32
    %c0_i32_1 = arith.constant 0 : i32
    %5 = arith.cmpi ne, %4, %c0_i32_1 : i32
    scf.if %5 {
      %c0_i32_2 = arith.constant 0 : i32
      %6 = arith.cmpi eq, %arg1, %c0_i32_2 : i32
      %7 = arith.extui %6 : i1 to i32
      %c0_i32_3 = arith.constant 0 : i32
      %8 = arith.cmpi ne, %7, %c0_i32_3 : i32
      scf.if %8 {
        %c0_15 = arith.constant 0 : index
        %c0_16 = arith.constant 0 : index
        %28 = vector.load %arg10[%c0_15, %c0_16] : memref<1x256xf32, #tpu.memory_space<vmem>>, vector<1x256xf32>
        %cst_17 = arith.constant 1.562500e-02 : f32
        %29 = vector.broadcast %cst_17 : f32 to vector<1x256xf32>
        %30 = arith.mulf %28, %29 : vector<1x256xf32>
        %c0_18 = arith.constant 0 : index
        %c0_19 = arith.constant 0 : index
        %31 = vector.load %arg11[%c0_18, %c0_19] : memref<1x256xf32, #tpu.memory_space<vmem>>, vector<1x256xf32>
        %cst_20 = arith.constant 1.562500e-02 : f32
        %32 = vector.broadcast %cst_20 : f32 to vector<1x256xf32>
        %33 = arith.mulf %31, %32 : vector<1x256xf32>
        %34 = arith.mulf %30, %30 : vector<1x256xf32>
        %35 = arith.subf %33, %34 : vector<1x256xf32>
        %cst_21 = arith.constant 0.000000e+00 : f32
        %36 = vector.broadcast %cst_21 : f32 to vector<1x256xf32>
        %37 = arith.maximumf %35, %36 : vector<1x256xf32>
        %c0_22 = arith.constant 0 : index
        %c0_23 = arith.constant 0 : index
        %38 = vector.load %arg4[%c0_22, %c0_23] : memref<1x256xf32, #tpu.memory_space<vmem>>, vector<1x256xf32>
        %cst_24 = arith.constant 9.99999974E-6 : f32
        %39 = vector.broadcast %cst_24 : f32 to vector<1x256xf32>
        %40 = arith.addf %37, %39 : vector<1x256xf32>
        %41 = math.rsqrt %40 : vector<1x256xf32>
        %42 = arith.mulf %38, %41 : vector<1x256xf32>
        %c0_25 = arith.constant 0 : index
        %c0_26 = arith.constant 0 : index
        %43 = vector.load %arg5[%c0_25, %c0_26] : memref<1x256xf32, #tpu.memory_space<vmem>>, vector<1x256xf32>
        %44 = arith.mulf %30, %42 : vector<1x256xf32>
        %45 = arith.subf %43, %44 : vector<1x256xf32>
        %c0_27 = arith.constant 0 : index
        %c0_28 = arith.constant 0 : index
        %46 = vector.load %arg12[%c0_27, %c0_28] : memref<2x256xf32, #tpu.memory_space<vmem>>, vector<1x256xf32>
        tpu.vector_store %arg12[%c0_27, %c0_28], %42 {strides = array<i32>} : memref<2x256xf32, #tpu.memory_space<vmem>>, vector<1x256xf32>,
        %c1_29 = arith.constant 1 : index
        %c0_30 = arith.constant 0 : index
        %47 = vector.load %arg12[%c1_29, %c0_30] : memref<2x256xf32, #tpu.memory_space<vmem>>, vector<1x256xf32>
        tpu.vector_store %arg12[%c1_29, %c0_30], %45 {strides = array<i32>} : memref<2x256xf32, #tpu.memory_space<vmem>>, vector<1x256xf32>,
      } else {
      }
      %9 = arith.index_cast %arg1 : i32 to index
      %c0 = arith.constant 0 : index
      %c0_4 = arith.constant 0 : index
      %10 = vector.load %arg9[%9, %c0, %c0_4] : memref<2x32x256xf32, #tpu.memory_space<vmem>>, vector<1x32x256xf32>
      %11 = vector.shape_cast %10 : vector<1x32x256xf32> to vector<32x256xf32>
      %c0_5 = arith.constant 0 : index
      %c0_6 = arith.constant 0 : index
      %12 = vector.load %arg12[%c0_5, %c0_6] : memref<2x256xf32, #tpu.memory_space<vmem>>, vector<1x256xf32>
      %13 = vector.broadcast %12 : vector<1x256xf32> to vector<32x256xf32>
      %14 = arith.mulf %11, %13 : vector<32x256xf32>
      %c1 = arith.constant 1 : index
      %c0_7 = arith.constant 0 : index
      %15 = vector.load %arg12[%c1, %c0_7] : memref<2x256xf32, #tpu.memory_space<vmem>>, vector<1x256xf32>
      %16 = vector.broadcast %15 : vector<1x256xf32> to vector<32x256xf32>
      %17 = arith.addf %14, %16 : vector<32x256xf32>
      %cst = arith.constant 0.000000e+00 : f32
      %18 = vector.broadcast %cst : f32 to vector<32x256xf32>
      %19 = arith.maximumf %17, %18 : vector<32x256xf32>
      %20 = arith.truncf %19 : vector<32x256xf32> to vector<32x256xbf16>
      %c0_8 = arith.constant 0 : index
      %c0_9 = arith.constant 0 : index
      %21 = vector.load %arg6[%c0_8, %c0_9] : memref<256x128xf32, #tpu.memory_space<vmem>>, vector<256x128xf32>
      %22 = arith.truncf %21 : vector<256x128xf32> to vector<256x128xbf16>
      %cst_10 = arith.constant dense<0.000000e+00> : vector<32x128xf32>
      %23 = tpu.matmul %20, %22, %cst_10 {dimension_numbers = #tpu.dot_dimension_numbers<[1], [0], [0], [1], [0, 0, 1, 1], [], []>} : vector<32x256xbf16>, vector<256x128xbf16>, vector<32x128xf32> -> vector<32x128xf32>
      %c0_11 = arith.constant 0 : index
      %c0_12 = arith.constant 0 : index
      %24 = vector.load %arg7[%c0_11, %c0_12] : memref<1x128xf32, #tpu.memory_space<vmem>>, vector<1x128xf32>
      %25 = vector.broadcast %24 : vector<1x128xf32> to vector<32x128xf32>
      %26 = arith.addf %23, %25 : vector<32x128xf32>
      %c0_13 = arith.constant 0 : index
      %c0_14 = arith.constant 0 : index
      %27 = vector.load %arg8[%c0_13, %c0_14] : memref<32x128xf32, #tpu.memory_space<vmem>>, vector<32x128xf32>
      tpu.vector_store %arg8[%c0_13, %c0_14], %26 {strides = array<i32>} : memref<32x128xf32, #tpu.memory_space<vmem>>, vector<32x128xf32>,
    } else {
    }
    return
  }
  func.func @transform_0(%arg0: i32, %arg1: i32) -> (i32, i32) {
    %c1_i32 = arith.constant 1 : i32
    %0 = arith.subi %c1_i32, %arg0 : i32
    %1 = arith.muli %arg1, %0 : i32
    %c1_i32_0 = arith.constant 1 : i32
    %2 = arith.muli %c1_i32_0, %arg0 : i32
    %3 = arith.addi %1, %2 : i32
    %c0_i32 = arith.constant 0 : i32
    %c0_i32_1 = arith.constant 0 : i32
    return %3, %c0_i32 : i32, i32
  }
  func.func @transform_1(%arg0: i32, %arg1: i32) -> (i32, i32) {
    %c0_i32 = arith.constant 0 : i32
    %c0_i32_0 = arith.constant 0 : i32
    %c0_i32_1 = arith.constant 0 : i32
    return %c0_i32, %c0_i32_0 : i32, i32
  }
  func.func @transform_2(%arg0: i32, %arg1: i32) -> (i32, i32) {
    %c0_i32 = arith.constant 0 : i32
    %c0_i32_0 = arith.constant 0 : i32
    %c0_i32_1 = arith.constant 0 : i32
    return %c0_i32, %c0_i32_0 : i32, i32
  }
  func.func @transform_3(%arg0: i32, %arg1: i32) -> (i32, i32) {
    %c0_i32 = arith.constant 0 : i32
    %c0_i32_0 = arith.constant 0 : i32
    %c0_i32_1 = arith.constant 0 : i32
    return %c0_i32, %c0_i32_0 : i32, i32
  }
  func.func @transform_4(%arg0: i32, %arg1: i32) -> (i32, i32) {
    %c0_i32 = arith.constant 0 : i32
    %c0_i32_0 = arith.constant 0 : i32
    %c0_i32_1 = arith.constant 0 : i32
    return %c0_i32, %c0_i32_0 : i32, i32
  }
  func.func @transform_5(%arg0: i32, %arg1: i32) -> (i32, i32) {
    %c0_i32 = arith.constant 0 : i32
    %c0_i32_0 = arith.constant 0 : i32
    %c0_i32_1 = arith.constant 0 : i32
    return %c0_i32, %c0_i32_0 : i32, i32
  }
  func.func @transform_6(%arg0: i32, %arg1: i32) -> (i32, i32) {
    %0 = arith.muli %arg1, %arg0 : i32
    %c0_i32 = arith.constant 0 : i32
    %c0_i32_0 = arith.constant 0 : i32
    return %0, %c0_i32 : i32, i32
  }
}

</mosaic_0001>

<llo_original>
// kernel: tpu_custom_call.1
$region0: #{tpu_custom_call.1}
  #allocation0 [shape = 'u32[]', space=smem, size = 0x4, offset = 0x4, fixed_abs, tag = 'smem constant byte address 0x4 - core index']
  #allocation1 [shape = 'u32[144,128]{1,0:T(1,128)}', space=vmem, size = 0x12000, scoped, tag = 'internal scratch']
  #allocation2 [shape = 'f32[2,32,256]{2,1,0:T(8,128)}', space=vmem, size = 0x10000, scoped, tag = 'scratch operand']
  #allocation3 [shape = 'f32[1,256]{1,0:T(1,128)}', space=vmem, size = 0x400, scoped, tag = 'scratch operand']
  #allocation4 [shape = 'f32[1,256]{1,0:T(1,128)}', space=vmem, size = 0x400, scoped, tag = 'scratch operand']
  #allocation5 [shape = 'f32[2,256]{1,0:T(2,128)}', space=vmem, size = 0x800, scoped, tag = 'scratch operand']
  %s0 = inlined_call_operand.hbm [shape: f32[64,256], index: 0, kind: input, shape index: {}]
  %s1 = inlined_call_operand.hbm [shape: f32[256,256], index: 1, kind: input, shape index: {}]
  %s2 = inlined_call_operand.vmem [shape: f32[1,256], index: 2, kind: input, shape index: {}]
  %s3 = inlined_call_operand.vmem [shape: f32[1,256], index: 3, kind: input, shape index: {}]
  %s4 = inlined_call_operand.hbm [shape: f32[256,128], index: 4, kind: input, shape index: {}]
  %s5 = inlined_call_operand.vmem [shape: f32[1,128], index: 5, kind: input, shape index: {}]
  %s6 = inlined_call_operand.hbm [shape: f32[64,128], index: 6, kind: output, shape index: {}]
  %s7 = sld [smem:[#allocation0]]
  $region85: #{tpu_custom_call.1} parent=0
    _
  %s9 = ssub.s32 1, %s7
  %s10 = scalar_select 0, %s9, %s7
  $region1: #{tpu_custom_call.1} parent=0
    #allocation6 [shape = 'u8[65536]{0}', space=vmem, size = 0x10000, scoped, tag = 'input window, operand 0']
    #allocation7 [shape = 's32[2]{0}', space=sflag, size = 0x8, scoped, tag = 'scoped memory for tpu_custom_call.1']
    #allocation8 [shape = 's32[2]{0}', space=sflag, size = 0x8, scoped, tag = 'scoped memory for tpu_custom_call.1']
    #allocation9 [shape = 'u8[262144]{0}', space=vmem, size = 0x40000, scoped, tag = 'input window, operand 1, single buffered']
    #allocation10 [shape = 's32[1]{0}', space=sflag, size = 0x4, scoped, tag = 'scoped memory for tpu_custom_call.1']
    #allocation11 [shape = 'u8[131072]{0}', space=vmem, size = 0x20000, scoped, tag = 'input window, operand 4, single buffered']
    #allocation12 [shape = 'u8[32768]{0}', space=vmem, size = 0x8000, scoped, tag = 'output window, operand 0']
    %11 = vsyncpa [#allocation7], 0
    %s12 = scalar_lea.sflag [#allocation7], 1
    %13 = vsyncpa %s12, 0
    %14 = vsyncpa [#allocation10], 0
    %15 = vsyncpa [#allocation8], 0
    %s16 = scalar_lea.sflag [#allocation8], 1
    %17 = vsyncpa %s16, 0
    loop: start=0, step=1, limit=6
    $region2: #{tpu_custom_call.1} parent=1 // loop_pre_header
      _
    $region3: #{tpu_custom_call.1} parent=1 // loop_header
      %s19 = sphi 0, %s23
      %p20 = scmp.ge.s32.totalorder %s19, 6
      %s26 = sphi 0, %s38
      %s27 = sphi 0, %s34
      %s28 = sphi 0, %s26
      %s29 = sphi 0, %s27
      %s30 = sphi 0, %s28
      %s31 = sphi 0, %s29
      %s47 = sphi 0, %s49
      %s50 = sphi 0, %s47
      %s51 = sphi 0, %s50
      %s67 = sphi 0, %s51
      %s71 = sphi 0, %s71
      %s73 = sphi 0, %s71
      %s74 = sphi 0, %s73
      %s88 = sphi 0, %s74
      %s92 = sphi 0, %s92
      %s94 = sphi 0, %s92
      %s95 = sphi 0, %s94
      %s109 = sphi 0, %s95
      %s113 = sphi 0, %s113
      %s115 = sphi 0, %s113
      %s116 = sphi 0, %s115
      %s130 = sphi 0, %s116
      %s134 = sphi 0, %s134
      %s136 = sphi 0, %s134
      %s137 = sphi 0, %s136
      %s151 = sphi 0, %s137
      %s155 = sphi 0, %s155
      %s157 = sphi 0, %s155
      %s158 = sphi 0, %s157
      %s172 = sphi 0, %s158
      %s180 = sphi 0, %s182
      %s183 = sphi 0, %s180
      %s184 = sphi 0, %s183
      %s200 = sphi 0, %s184
    $region4: #{tpu_custom_call.1} parent=1 // loop_header_branch
      %22 = sbr.rel (%p20) target = $region8
    $region5: #{tpu_custom_call.1} parent=1 // loop_body
      %s24 = ssub.s32 %s19, 1
      %s25 = ssub.s32 %s19, 2
      %s32 = sadd.s32 1, %s27
      %p33 = scmp.ge.s32.totalorder %s32, 2
      %s34 = scalar_select %p33, 0, %s32
      %s35 = sadd.s32 1, %s26
      %s36 = scalar_select %p33, %s35, %s26
      %p37 = scmp.ge.s32.totalorder %s36, 2
      %s38 = scalar_select %p37, 0, %s36
      %s39 = ssub.s32 1, %s26
      %s40 = smul.u32 %s27, %s39
      %s41 = sadd.s32 %s40, %s26
      %s42 = ssub.s32 1, %s38
      %s43 = smul.u32 %s34, %s42
      %s44 = sadd.s32 %s43, %s38
      %s45 = ssub.s32 %s41, %s44
      %p46 = scmp.eq.s32.totalorder %s45, 0
      %s48 = sadd.s32 %s47, 1
      %s49 = scalar_select %p46, %s47, %s48
      %p52 = pneg %p46
      %p53 = scmp.eq.s32.totalorder %s19, 3
      %p54 = por %p52, %p53
      %p55 = scmp.ne.s32.totalorder %s47, %s50
      %p56 = scmp.eq.s32.totalorder %s19, 0
      %p57 = por %p55, %p56
      %p58 = scmp.ne.s32.totalorder %s47, %s50
      %p59 = scmp.eq.s32.totalorder %s24, 3
      %p60 = por %p58, %p59
      %p61 = scmp.ne.s32.totalorder %s50, %s51
      %p62 = scmp.eq.s32.totalorder %s24, 0
      %p63 = por %p61, %p62
      %p64 = scmp.ne.s32.totalorder %s50, %s51
      %p65 = scmp.eq.s32.totalorder %s25, 3
      %p66 = por %p64, %p65
      %p68 = scmp.ne.s32.totalorder %s51, %s67
      %p69 = scmp.eq.s32.totalorder %s25, 0
      %p70 = por %p68, %p69
      %s72 = sadd.s32 %s71, 1
      %p75 = scmp.eq.s32.totalorder %s19, 3
      %p76 = scmp.ne.s32.totalorder %s71, %s73
      %p77 = scmp.eq.s32.totalorder %s19, 0
      %p78 = por %p76, %p77
      %p79 = scmp.ne.s32.totalorder %s71, %s73
      %p80 = scmp.eq.s32.totalorder %s24, 3
      %p81 = por %p79, %p80
      %p82 = scmp.ne.s32.totalorder %s73, %s74
      %p83 = scmp.eq.s32.totalorder %s24, 0
      %p84 = por %p82, %p83
      %p85 = scmp.ne.s32.totalorder %s73, %s74
      %p86 = scmp.eq.s32.totalorder %s25, 3
      %p87 = por %p85, %p86
      %p89 = scmp.ne.s32.totalorder %s74, %s88
      %p90 = scmp.eq.s32.totalorder %s25, 0
      %p91 = por %p89, %p90
      %s93 = sadd.s32 %s92, 1
      %p96 = scmp.eq.s32.totalorder %s19, 3
      %p97 = scmp.ne.s32.totalorder %s92, %s94
      %p98 = scmp.eq.s32.totalorder %s19, 0
      %p99 = por %p97, %p98
      %p100 = scmp.ne.s32.totalorder %s92, %s94
      %p101 = scmp.eq.s32.totalorder %s24, 3
      %p102 = por %p100, %p101
      %p103 = scmp.ne.s32.totalorder %s94, %s95
      %p104 = scmp.eq.s32.totalorder %s24, 0
      %p105 = por %p103, %p104
      %p106 = scmp.ne.s32.totalorder %s94, %s95
      %p107 = scmp.eq.s32.totalorder %s25, 3
      %p108 = por %p106, %p107
      %p110 = scmp.ne.s32.totalorder %s95, %s109
      %p111 = scmp.eq.s32.totalorder %s25, 0
      %p112 = por %p110, %p111
      %s114 = sadd.s32 %s113, 1
      %p117 = scmp.eq.s32.totalorder %s19, 3
      %p118 = scmp.ne.s32.totalorder %s113, %s115
      %p119 = scmp.eq.s32.totalorder %s19, 0
      %p120 = por %p118, %p119
      %p121 = scmp.ne.s32.totalorder %s113, %s115
      %p122 = scmp.eq.s32.totalorder %s24, 3
      %p123 = por %p121, %p122
      %p124 = scmp.ne.s32.totalorder %s115, %s116
      %p125 = scmp.eq.s32.totalorder %s24, 0
      %p126 = por %p124, %p125
      %p127 = scmp.ne.s32.totalorder %s115, %s116
      %p128 = scmp.eq.s32.totalorder %s25, 3
      %p129 = por %p127, %p128
      %p131 = scmp.ne.s32.totalorder %s116, %s130
      %p132 = scmp.eq.s32.totalorder %s25, 0
      %p133 = por %p131, %p132
      %s135 = sadd.s32 %s134, 1
      %p138 = scmp.eq.s32.totalorder %s19, 3
      %p139 = scmp.ne.s32.totalorder %s134, %s136
      %p140 = scmp.eq.s32.totalorder %s19, 0
      %p141 = por %p139, %p140
      %p142 = scmp.ne.s32.totalorder %s134, %s136
      %p143 = scmp.eq.s32.totalorder %s24, 3
      %p144 = por %p142, %p143
      %p145 = scmp.ne.s32.totalorder %s136, %s137
      %p146 = scmp.eq.s32.totalorder %s24, 0
      %p147 = por %p145, %p146
      %p148 = scmp.ne.s32.totalorder %s136, %s137
      %p149 = scmp.eq.s32.totalorder %s25, 3
      %p150 = por %p148, %p149
      %p152 = scmp.ne.s32.totalorder %s137, %s151
      %p153 = scmp.eq.s32.totalorder %s25, 0
      %p154 = por %p152, %p153
      %s156 = sadd.s32 %s155, 1
      %p159 = scmp.eq.s32.totalorder %s19, 3
      %p160 = scmp.ne.s32.totalorder %s155, %s157
      %p161 = scmp.eq.s32.totalorder %s19, 0
      %p162 = por %p160, %p161
      %p163 = scmp.ne.s32.totalorder %s155, %s157
      %p164 = scmp.eq.s32.totalorder %s24, 3
      %p165 = por %p163, %p164
      %p166 = scmp.ne.s32.totalorder %s157, %s158
      %p167 = scmp.eq.s32.totalorder %s24, 0
      %p168 = por %p166, %p167
      %p169 = scmp.ne.s32.totalorder %s157, %s158
      %p170 = scmp.eq.s32.totalorder %s25, 3
      %p171 = por %p169, %p170
      %p173 = scmp.ne.s32.totalorder %s158, %s172
      %p174 = scmp.eq.s32.totalorder %s25, 0
      %p175 = por %p173, %p174
      %s176 = smul.u32 %s27, %s26
      %s177 = smul.u32 %s34, %s38
      %s178 = ssub.s32 %s176, %s177
      %p179 = scmp.eq.s32.totalorder %s178, 0
      %s181 = sadd.s32 %s180, 1
      %s182 = scalar_select %p179, %s180, %s181
      %p185 = pneg %p179
      %p186 = scmp.eq.s32.totalorder %s19, 3
      %p187 = por %p185, %p186
      %p188 = scmp.ne.s32.totalorder %s180, %s183
      %p189 = scmp.eq.s32.totalorder %s19, 0
      %p190 = por %p188, %p189
      %p191 = scmp.ne.s32.totalorder %s180, %s183
      %p192 = scmp.eq.s32.totalorder %s24, 3
      %p193 = por %p191, %p192
      %p194 = scmp.ne.s32.totalorder %s183, %s184
      %p195 = scmp.eq.s32.totalorder %s24, 0
      %p196 = por %p194, %p195
      %p197 = scmp.ne.s32.totalorder %s183, %s184
      %p198 = scmp.eq.s32.totalorder %s25, 3
      %p199 = por %p197, %p198
      %p201 = scmp.ne.s32.totalorder %s184, %s200
      %p202 = scmp.eq.s32.totalorder %s25, 0
      %p203 = por %p201, %p202
      %p204 = scmp.le.s32.totalorder 1, %s19
      %p205 = scmp.lt.s32.totalorder %s19, 5
      %p206 = pnand %p204, %p205
      %p207 = pneg %p206
      // Predicated region
      $region9: #{tpu_custom_call.1} parent=5 // pred_check
        _
      $region10: #{tpu_custom_call.1} parent=5 // pred_check_branch
        %209 = sbr.rel (%p206) target = $region12
      $region11: #{tpu_custom_call.1} parent=5 // pred_region
        %s210 = ssub.s32 %s19, 1
        // Predicated region
        $region13: #{tpu_custom_call.1} parent=11 // pred_check
          %p211 = pneg %p84
        $region14: #{tpu_custom_call.1} parent=11 // pred_check_branch
          %213 = sbr.rel (%p211) target = $region16
        $region15: #{tpu_custom_call.1} parent=11 // pred_region
          %s215 = ssub.s32 8192, 8192
          %216 = vsyncadd [#allocation10], %s215
          %s217 = sshll.u32 [#allocation9], 4
          %s218 = int_to_ptr.vmem [resolvable:$true] %s217
          %223 = dma.hbm_to_vmem [thread:$0]  %s1, 8192, %s218, [#allocation10], 256, 256, 16
        $region16: #{tpu_custom_call.1} parent=11 // pred_fallthru
          _
        // Predicated region
        $region17: #{tpu_custom_call.1} parent=11 // pred_check
          %p224 = pneg %p105
        $region18: #{tpu_custom_call.1} parent=11 // pred_check_branch
          %226 = sbr.rel (%p224) target = $region20
        $region19: #{tpu_custom_call.1} parent=11 // pred_region
          _
        $region20: #{tpu_custom_call.1} parent=11 // pred_fallthru
          _
        // Predicated region
        $region21: #{tpu_custom_call.1} parent=11 // pred_check
          %p227 = pneg %p126
        $region22: #{tpu_custom_call.1} parent=11 // pred_check_branch
          %229 = sbr.rel (%p227) target = $region24
        $region23: #{tpu_custom_call.1} parent=11 // pred_region
          _
        $region24: #{tpu_custom_call.1} parent=11 // pred_fallthru
          _
        // Predicated region
        $region25: #{tpu_custom_call.1} parent=11 // pred_check
          %p230 = pneg %p147
        $region26: #{tpu_custom_call.1} parent=11 // pred_check_branch
          %232 = sbr.rel (%p230) target = $region28
        $region27: #{tpu_custom_call.1} parent=11 // pred_region
          %s234 = ssub.s32 4096, 4096
          %235 = vsyncadd [#allocation10], %s234
          %s236 = sshll.u32 [#allocation11], 4
          %s237 = int_to_ptr.vmem [resolvable:$true] %s236
          %242 = dma.hbm_to_vmem [thread:$0]  %s4, 4096, %s237, [#allocation10], 128, 128, 8
        $region28: #{tpu_custom_call.1} parent=11 // pred_fallthru
          _
        // Predicated region
        $region29: #{tpu_custom_call.1} parent=11 // pred_check
          %p243 = pneg %p168
        $region30: #{tpu_custom_call.1} parent=11 // pred_check_branch
          %245 = sbr.rel (%p243) target = $region32
        $region31: #{tpu_custom_call.1} parent=11 // pred_region
          _
        $region32: #{tpu_custom_call.1} parent=11 // pred_fallthru
          _
      $region12: #{tpu_custom_call.1} parent=5 // pred_fallthru
        _
      %p246 = scmp.lt.s32.totalorder %s19, 4
      // Predicated region
      $region33: #{tpu_custom_call.1} parent=5 // pred_check
        %p247 = pneg %p246
      $region34: #{tpu_custom_call.1} parent=5 // pred_check_branch
        %249 = sbr.rel (%p247) target = $region36
      $region35: #{tpu_custom_call.1} parent=5 // pred_region
        // Predicated region
        $region37: #{tpu_custom_call.1} parent=35 // pred_check
          %p250 = pneg %p57
        $region38: #{tpu_custom_call.1} parent=35 // pred_check_branch
          %252 = sbr.rel (%p250) target = $region40
        $region39: #{tpu_custom_call.1} parent=35 // pred_region
          %s253 = sand.u32 %s47, 1
          %s254 = scalar_lea.sflag [#allocation7], %s253
          %s255 = sand.u32 %s47, 1
          %s256 = smul.addr %s255, 64
          %s257 = scalar_lea.vmem [#allocation6], %s256
          %s258 = ssub.s32 1, %s26
          %s259 = smul.u32 %s27, %s258
          %s260 = sadd.s32 %s259, %s26
          %s261 = smul.u32 4, %s260
          %s263 = ssub.s32 1024, 1024
          %264 = vsyncadd %s254, %s263
          %s265 = smul.addr %s261, 2
          %s266 = smul.addr %s265, 128
          %s267 = scalar_lea.hbm %s0, %s266
          %s268 = sshll.u32 %s257, 4
          %s269 = int_to_ptr.vmem [resolvable:$true] %s268
          %274 = dma.hbm_to_vmem [thread:$0]  %s267, 1024, %s269, %s254, 256, 256, 16
        $region40: #{tpu_custom_call.1} parent=35 // pred_fallthru
          _
      $region36: #{tpu_custom_call.1} parent=5 // pred_fallthru
        _
      %p275 = scmp.le.s32.totalorder 1, %s19
      %p276 = scmp.lt.s32.totalorder %s19, 5
      %p277 = pnand %p275, %p276
      %p278 = pneg %p277
      // Predicated region
      $region41: #{tpu_custom_call.1} parent=5 // pred_check
        _
      $region42: #{tpu_custom_call.1} parent=5 // pred_check_branch
        %280 = sbr.rel (%p277) target = $region44
      $region43: #{tpu_custom_call.1} parent=5 // pred_region
        %s281 = ssub.s32 %s19, 1
        %s282 = sand.u32 %s50, 1
        %s283 = scalar_lea.sflag [#allocation7], %s282
        %s284 = sand.u32 %s50, 1
        %s285 = smul.addr %s284, 64
        %s286 = scalar_lea.vmem [#allocation6], %s285
        // Predicated region
        $region45: #{tpu_custom_call.1} parent=43 // pred_check
          %p287 = pneg %p63
        $region46: #{tpu_custom_call.1} parent=43 // pred_check_branch
          %289 = sbr.rel (%p287) target = $region48
        $region47: #{tpu_custom_call.1} parent=43 // pred_region
          %290 = dma.done %s283, 1024
        $region48: #{tpu_custom_call.1} parent=43 // pred_fallthru
          _
        // Predicated region
        $region49: #{tpu_custom_call.1} parent=43 // pred_check
          %p291 = pneg %p84
        $region50: #{tpu_custom_call.1} parent=43 // pred_check_branch
          %293 = sbr.rel (%p291) target = $region52
        $region51: #{tpu_custom_call.1} parent=43 // pred_region
          %294 = dma.done [#allocation10], 8192
        $region52: #{tpu_custom_call.1} parent=43 // pred_fallthru
          _
        // Predicated region
        $region53: #{tpu_custom_call.1} parent=43 // pred_check
          %p295 = pneg %p147
        $region54: #{tpu_custom_call.1} parent=43 // pred_check_branch
          %297 = sbr.rel (%p295) target = $region56
        $region55: #{tpu_custom_call.1} parent=43 // pred_region
          %298 = dma.done [#allocation10], 4096
        $region56: #{tpu_custom_call.1} parent=43 // pred_fallthru
          _
        %s299 = sand.u32 %s50, 1
        %s300 = scalar_lea.sflag [#allocation7], %s299
        %s301 = sand.u32 %s50, 1
        %s302 = smul.addr %s301, 64
        %s303 = scalar_lea.vmem [#allocation6], %s302
        %p304 = pneg %p63
        %p305 = pneg %p60
        %p306 = pneg %p84
        %p307 = pneg %p81
        %p308 = pneg %p105
        %p309 = pneg %p102
        %p310 = pneg %p126
        %p311 = pneg %p123
        %p312 = pneg %p147
        %p313 = pneg %p144
        %p314 = pneg %p168
        %p315 = pneg %p165
        %p316 = pneg %p196
        %p317 = pneg %p193
        %s318 = sand.u32 %s183, 1
        %s319 = scalar_lea.sflag [#allocation8], %s318
        %s320 = sand.u32 %s183, 1
        %s321 = smul.addr %s320, 32
        %s322 = scalar_lea.vmem [#allocation12], %s321
        %s323 = ssub.s32 1, %s28
        %s324 = smul.u32 %s29, %s323
        %s325 = sadd.s32 %s324, %s28
        %s326 = smul.u32 4, %s325
        %s327 = smul.u32 %s29, %s28
        %s328 = smul.u32 4, %s327
        %p330 = scmp.eq.s32.totalorder %s28, 0
        // Predicated region
        $region57: #{tpu_custom_call.1} parent=43 // pred_check
          %p331 = pneg %p330
        $region58: #{tpu_custom_call.1} parent=43 // pred_check_branch
          %333 = sbr.rel (%p331) target = $region60
        $region59: #{tpu_custom_call.1} parent=43 // pred_region
          %v334 = vld [vmem:[%s286] sm:$0xff]
          %v335 = vld [vmem:[%s286 + $0x8] sm:$0xff]
          %v336 = vld [vmem:[%s286 + $0x10] sm:$0xff]
          %v337 = vld [vmem:[%s286 + $0x18] sm:$0xff]
          %v338 = vld [vmem:[%s286 + $0x20] sm:$0xff]
          %v339 = vld [vmem:[%s286 + $0x28] sm:$0xff]
          %v340 = vld [vmem:[%s286 + $0x30] sm:$0xff]
          %v341 = vld [vmem:[%s286 + $0x38] sm:$0xff]
          %v342 = vpack.c.bf16 %v336, %v334
          %v343 = vpack.c.bf16 %v337, %v335
          %v344 = vpack.c.bf16 %v340, %v338
          %v345 = vpack.c.bf16 %v341, %v339
          %v346 = vld [vmem:[#allocation9] sm:$0xff]
          %v347 = vld [vmem:[#allocation9 + $0x8] sm:$0xff]
          %v348 = vld [vmem:[#allocation9 + $0x10] sm:$0xff]
          %v349 = vld [vmem:[#allocation9 + $0x18] sm:$0xff]
          %v350 = vld [vmem:[#allocation9 + $0x20] sm:$0xff]
          %v351 = vld [vmem:[#allocation9 + $0x28] sm:$0xff]
          %v352 = vld [vmem:[#allocation9 + $0x30] sm:$0xff]
          %v353 = vld [vmem:[#allocation9 + $0x38] sm:$0xff]
          %v354 = vld [vmem:[#allocation9 + $0x40] sm:$0xff]
          %v355 = vld [vmem:[#allocation9 + $0x48] sm:$0xff]
          %v356 = vld [vmem:[#allocation9 + $0x50] sm:$0xff]
          %v357 = vld [vmem:[#allocation9 + $0x58] sm:$0xff]
          %v358 = vld [vmem:[#allocation9 + $0x60] sm:$0xff]
          %v359 = vld [vmem:[#allocation9 + $0x68] sm:$0xff]
          %v360 = vld [vmem:[#allocation9 + $0x70] sm:$0xff]
          %v361 = vld [vmem:[#allocation9 + $0x78] sm:$0xff]
          %v362 = vld [vmem:[#allocation9 + $0x80] sm:$0xff]
          %v363 = vld [vmem:[#allocation9 + $0x88] sm:$0xff]
          %v364 = vld [vmem:[#allocation9 + $0x90] sm:$0xff]
          %v365 = vld [vmem:[#allocation9 + $0x98] sm:$0xff]
          %v366 = vld [vmem:[#allocation9 + $0xa0] sm:$0xff]
          %v367 = vld [vmem:[#allocation9 + $0xa8] sm:$0xff]
          %v368 = vld [vmem:[#allocation9 + $0xb0] sm:$0xff]
          %v369 = vld [vmem:[#allocation9 + $0xb8] sm:$0xff]
          %v370 = vld [vmem:[#allocation9 + $0xc0] sm:$0xff]
          %v371 = vld [vmem:[#allocation9 + $0xc8] sm:$0xff]
          %v372 = vld [vmem:[#allocation9 + $0xd0] sm:$0xff]
          %v373 = vld [vmem:[#allocation9 + $0xd8] sm:$0xff]
          %v374 = vld [vmem:[#allocation9 + $0xe0] sm:$0xff]
          %v375 = vld [vmem:[#allocation9 + $0xe8] sm:$0xff]
          %v376 = vld [vmem:[#allocation9 + $0xf0] sm:$0xff]
          %v377 = vld [vmem:[#allocation9 + $0xf8] sm:$0xff]
          %v378 = vld [vmem:[#allocation9 + $0x100] sm:$0xff]
          %v379 = vld [vmem:[#allocation9 + $0x108] sm:$0xff]
          %v380 = vld [vmem:[#allocation9 + $0x110] sm:$0xff]
          %v381 = vld [vmem:[#allocation9 + $0x118] sm:$0xff]
          %v382 = vld [vmem:[#allocation9 + $0x120] sm:$0xff]
          %v383 = vld [vmem:[#allocation9 + $0x128] sm:$0xff]
          %v384 = vld [vmem:[#allocation9 + $0x130] sm:$0xff]
          %v385 = vld [vmem:[#allocation9 + $0x138] sm:$0xff]
          %v386 = vld [vmem:[#allocation9 + $0x140] sm:$0xff]
          %v387 = vld [vmem:[#allocation9 + $0x148] sm:$0xff]
          %v388 = vld [vmem:[#allocation9 + $0x150] sm:$0xff]
          %v389 = vld [vmem:[#allocation9 + $0x158] sm:$0xff]
          %v390 = vld [vmem:[#allocation9 + $0x160] sm:$0xff]
          %v391 = vld [vmem:[#allocation9 + $0x168] sm:$0xff]
          %v392 = vld [vmem:[#allocation9 + $0x170] sm:$0xff]
          %v393 = vld [vmem:[#allocation9 + $0x178] sm:$0xff]
          %v394 = vld [vmem:[#allocation9 + $0x180] sm:$0xff]
          %v395 = vld [vmem:[#allocation9 + $0x188] sm:$0xff]
          %v396 = vld [vmem:[#allocation9 + $0x190] sm:$0xff]
          %v397 = vld [vmem:[#allocation9 + $0x198] sm:$0xff]
          %v398 = vld [vmem:[#allocation9 + $0x1a0] sm:$0xff]
          %v399 = vld [vmem:[#allocation9 + $0x1a8] sm:$0xff]
          %v400 = vld [vmem:[#allocation9 + $0x1b0] sm:$0xff]
          %v401 = vld [vmem:[#allocation9 + $0x1b8] sm:$0xff]
          %v402 = vld [vmem:[#allocation9 + $0x1c0] sm:$0xff]
          %v403 = vld [vmem:[#allocation9 + $0x1c8] sm:$0xff]
          %v404 = vld [vmem:[#allocation9 + $0x1d0] sm:$0xff]
          %v405 = vld [vmem:[#allocation9 + $0x1d8] sm:$0xff]
          %v406 = vld [vmem:[#allocation9 + $0x1e0] sm:$0xff]
          %v407 = vld [vmem:[#allocation9 + $0x1e8] sm:$0xff]
          %v408 = vld [vmem:[#allocation9 + $0x1f0] sm:$0xff]
          %v409 = vld [vmem:[#allocation9 + $0x1f8] sm:$0xff]
          %v410 = vpack.c.bf16 %v348, %v346
          %v411 = vpack.c.bf16 %v349, %v347
          %v412 = vpack.c.bf16 %v352, %v350
          %v413 = vpack.c.bf16 %v353, %v351
          %v414 = vpack.c.bf16 %v356, %v354
          %v415 = vpack.c.bf16 %v357, %v355
          %v416 = vpack.c.bf16 %v360, %v358
          %v417 = vpack.c.bf16 %v361, %v359
          %v418 = vpack.c.bf16 %v364, %v362
          %v419 = vpack.c.bf16 %v365, %v363
          %v420 = vpack.c.bf16 %v368, %v366
          %v421 = vpack.c.bf16 %v369, %v367
          %v422 = vpack.c.bf16 %v372, %v370
          %v423 = vpack.c.bf16 %v373, %v371
          %v424 = vpack.c.bf16 %v376, %v374
          %v425 = vpack.c.bf16 %v377, %v375
          %v426 = vpack.c.bf16 %v380, %v378
          %v427 = vpack.c.bf16 %v381, %v379
          %v428 = vpack.c.bf16 %v384, %v382
          %v429 = vpack.c.bf16 %v385, %v383
          %v430 = vpack.c.bf16 %v388, %v386
          %v431 = vpack.c.bf16 %v389, %v387
          %v432 = vpack.c.bf16 %v392, %v390
          %v433 = vpack.c.bf16 %v393, %v391
          %v434 = vpack.c.bf16 %v396, %v394
          %v435 = vpack.c.bf16 %v397, %v395
          %v436 = vpack.c.bf16 %v400, %v398
          %v437 = vpack.c.bf16 %v401, %v399
          %v438 = vpack.c.bf16 %v404, %v402
          %v439 = vpack.c.bf16 %v405, %v403
          %v440 = vpack.c.bf16 %v408, %v406
          %v441 = vpack.c.bf16 %v409, %v407
          %442 = vmatprep.subr.bf16.mxu0 %v411
          %443 = vmatpush1.bf16.msra.mxu0 %v410
          %444 = vmatprep.subr.bf16.mxu0 %v413
          %445 = vmatpush1.bf16.msra.mxu0 %v412
          %446 = vmatprep.subr.bf16.mxu0 %v415
          %447 = vmatpush1.bf16.msra.mxu0 %v414
          %448 = vmatprep.subr.bf16.mxu0 %v417
          %449 = vmatpush1.bf16.msra.mxu0 %v416
          %450 = vmatprep.subr.bf16.mxu0 %v419
          %451 = vmatpush1.bf16.msra.mxu0 %v418
          %452 = vmatprep.subr.bf16.mxu0 %v421
          %453 = vmatpush1.bf16.msra.mxu0 %v420
          %454 = vmatprep.subr.bf16.mxu0 %v423
          %455 = vmatpush1.bf16.msra.mxu0 %v422
          %456 = vmatprep.subr.bf16.mxu0 %v425
          %457 = vmatpush1.bf16.msra.mxu0 %v424
          %458 = vmatprep.subr.bf16.mxu0 %v427
          %459 = vmatpush1.bf16.msra.mxu0 %v426
          %460 = vmatprep.subr.bf16.mxu0 %v429
          %461 = vmatpush1.bf16.msra.mxu0 %v428
          %462 = vmatprep.subr.bf16.mxu0 %v431
          %463 = vmatpush1.bf16.msra.mxu0 %v430
          %464 = vmatprep.subr.bf16.mxu0 %v433
          %465 = vmatpush1.bf16.msra.mxu0 %v432
          %466 = vmatprep.subr.bf16.mxu0 %v435
          %467 = vmatpush1.bf16.msra.mxu0 %v434
          %468 = vmatprep.subr.bf16.mxu0 %v437
          %469 = vmatpush1.bf16.msra.mxu0 %v436
          %470 = vmatprep.subr.bf16.mxu0 %v439
          %471 = vmatpush1.bf16.msra.mxu0 %v438
          %472 = vmatprep.subr.bf16.mxu0 %v441
          %473 = vmatpush1.bf16.msra.mxu0 %v440
          %474 = vmatprep.mubr.bf16.mxu0 %v343
          %475 = vmatmul.mubr.bf16.gmra.mrb[0].mxu0 %v342
          %v476 = vpop.f32.mrb[0].mxu0
          %v477 = vadd.f32 0.0, %v476
          %v478 = vpop.f32.mrb[0].mxu0
          %v479 = vadd.f32 0.0, %v478
          %v480 = vpop.f32.mrb[0].mxu0
          %v481 = vadd.f32 0.0, %v480
          %v482 = vpop.f32.mrb[0].mxu0
          %v483 = vadd.f32 0.0, %v482
          %484 = vmatprep.mubr.bf16.mxu0 %v345
          %485 = vmatmul.mubr.bf16.gmra.mrb[0].mxu0 %v344
          %v486 = vpop.f32.mrb[0].mxu0
          %v487 = vadd.f32 0.0, %v486
          %v488 = vpop.f32.mrb[0].mxu0
          %v489 = vadd.f32 0.0, %v488
          %v490 = vpop.f32.mrb[0].mxu0
          %v491 = vadd.f32 0.0, %v490
          %v492 = vpop.f32.mrb[0].mxu0
          %v493 = vadd.f32 0.0, %v492
          %494 = vdwg.mxu0
          %s495 = smul.u32 %s29, 8
          %s496 = smul.addr %s495, 8
          %s497 = scalar_lea.vmem [#allocation2], %s496
          %498 = vst [vmem:[%s497] sm:$0xff] %v477
          %499 = vst [vmem:[%s497 + $0x8] sm:$0xff] %v479
          %500 = vst [vmem:[%s497 + $0x10] sm:$0xff] %v481
          %501 = vst [vmem:[%s497 + $0x18] sm:$0xff] %v483
          %502 = vst [vmem:[%s497 + $0x20] sm:$0xff] %v487
          %503 = vst [vmem:[%s497 + $0x28] sm:$0xff] %v489
          %504 = vst [vmem:[%s497 + $0x30] sm:$0xff] %v491
          %505 = vst [vmem:[%s497 + $0x38] sm:$0xff] %v493
          %p506 = scmp.eq.s32.totalorder %s29, 0
          // Predicated region
          $region61: #{tpu_custom_call.1} parent=59 // pred_check
            %p507 = pneg %p506
          $region62: #{tpu_custom_call.1} parent=59 // pred_check_branch
            %509 = sbr.rel (%p507) target = $region64
          $region63: #{tpu_custom_call.1} parent=59 // pred_region
            %v510 = vlaneseq
            %vm511 = vcmp.ge.s32.totalorder %v510, 0
            %vm512 = vcmp.lt.s32.totalorder %v510, 256
            %vm513 = vmand %vm511, %vm512
            %514 = vst.msk [vmem:[#allocation3] sm:$0x3] %vm513, 0.0
            %515 = vst.msk [vmem:[#allocation4] sm:$0x3] %vm513, 0.0
          $region64: #{tpu_custom_call.1} parent=59 // pred_fallthru
            _
          %v516 = vld [vmem:[#allocation3] sm:$0x3]
          %v517 = vadd.f32 %v477, %v481
          %v518 = vadd.f32 %v517, %v487
          %v519 = vadd.f32 %v518, %v491
          %v520 = vrot.slane %v519, 4
          %v521 = vadd.f32 %v519, %v520
          %v522 = vrot.slane %v521, 2
          %v523 = vadd.f32 %v521, %v522
          %v524 = vrot.slane %v523, 1
          %v525 = vadd.f32 %v523, %v524
          %v526 = vadd.f32 %v479, %v483
          %v527 = vadd.f32 %v526, %v489
          %v528 = vadd.f32 %v527, %v493
          %v529 = vrot.slane %v528, 4
          %v530 = vadd.f32 %v528, %v529
          %v531 = vrot.slane %v530, 2
          %v532 = vadd.f32 %v530, %v531
          %v533 = vrot.slane %v532, 1
          %v534 = vadd.f32 %v532, %v533
          %v537 = vcombine.low %v525, %v534
          %v539 = vunpack.c.l.s4 1966171168
          %v540 = vunpack.c.0.s8 %v539
          %v541 = vlaneseq
          %v542 = vshrl.u32 %v541, 7
          %v543 = vsub.s32 %v540, %v542
          %v544 = vrot.slane %v537, %v543
          %v546 = vunpack.c.l.s4 1966171168
          %v547 = vunpack.c.0.s8 %v546
          %v548 = vlaneseq
          %v549 = vshrl.u32 %v548, 7
          %v550 = vsub.s32 %v547, %v549
          %v551 = vrot.slane %v544, %v550
          %v553 = vadd.f32 %v516, %v551
          %v554 = vlaneseq
          %vm555 = vcmp.ge.s32.totalorder %v554, 0
          %vm556 = vcmp.lt.s32.totalorder %v554, 256
          %vm557 = vmand %vm555, %vm556
          %558 = vst.msk [vmem:[#allocation3] sm:$0x3] %vm557, %v553
          %v559 = vld [vmem:[#allocation4] sm:$0x3]
          %v560 = vmul.f32 %v477, %v477
          %v561 = vmul.f32 %v479, %v479
          %v562 = vmul.f32 %v481, %v481
          %v563 = vmul.f32 %v483, %v483
          %v564 = vmul.f32 %v487, %v487
          %v565 = vmul.f32 %v489, %v489
          %v566 = vmul.f32 %v491, %v491
          %v567 = vmul.f32 %v493, %v493
          %v568 = vadd.f32 %v560, %v562
          %v569 = vadd.f32 %v568, %v564
          %v570 = vadd.f32 %v569, %v566
          %v571 = vrot.slane %v570, 4
          %v572 = vadd.f32 %v570, %v571
          %v573 = vrot.slane %v572, 2
          %v574 = vadd.f32 %v572, %v573
          %v575 = vrot.slane %v574, 1
          %v576 = vadd.f32 %v574, %v575
          %v577 = vadd.f32 %v561, %v563
          %v578 = vadd.f32 %v577, %v565
          %v579 = vadd.f32 %v578, %v567
          %v580 = vrot.slane %v579, 4
          %v581 = vadd.f32 %v579, %v580
          %v582 = vrot.slane %v581, 2
          %v583 = vadd.f32 %v581, %v582
          %v584 = vrot.slane %v583, 1
          %v585 = vadd.f32 %v583, %v584
          %v588 = vcombine.low %v576, %v585
          %v590 = vunpack.c.l.s4 1966171168
          %v591 = vunpack.c.0.s8 %v590
          %v592 = vlaneseq
          %v593 = vshrl.u32 %v592, 7
          %v594 = vsub.s32 %v591, %v593
          %v595 = vrot.slane %v588, %v594
          %v597 = vunpack.c.l.s4 1966171168
          %v598 = vunpack.c.0.s8 %v597
          %v599 = vlaneseq
          %v600 = vshrl.u32 %v599, 7
          %v601 = vsub.s32 %v598, %v600
          %v602 = vrot.slane %v595, %v601
          %v604 = vadd.f32 %v559, %v602
          %605 = vst.msk [vmem:[#allocation4] sm:$0x3] %vm557, %v604
        $region60: #{tpu_custom_call.1} parent=43 // pred_fallthru
          _
        %p606 = scmp.eq.s32.totalorder %s28, 1
        // Predicated region
        $region65: #{tpu_custom_call.1} parent=43 // pred_check
          %p607 = pneg %p606
        $region66: #{tpu_custom_call.1} parent=43 // pred_check_branch
          %609 = sbr.rel (%p607) target = $region68
        $region67: #{tpu_custom_call.1} parent=43 // pred_region
          %p610 = scmp.eq.s32.totalorder %s29, 0
          // Predicated region
          $region69: #{tpu_custom_call.1} parent=67 // pred_check
            %p611 = pneg %p610
          $region70: #{tpu_custom_call.1} parent=67 // pred_check_branch
            %613 = sbr.rel (%p611) target = $region72
          $region71: #{tpu_custom_call.1} parent=67 // pred_region
            %v614 = vld [vmem:[#allocation3] sm:$0x3]
            %v615 = vmul.f32 %v614, 0.015625
            %v616 = vld [vmem:[#allocation4] sm:$0x3]
            %v617 = vmul.f32 %v616, 0.015625
            %v618 = vmul.f32 %v615, %v615
            %v619 = vsub.f32 %v617, %v618
            %v620 = vmax.f32 %v619, 0.0
            %v621 = vld [vmem:[%s2] sm:$0x3]
            %v622 = vadd.f32 %v620, 1e-05
            %v623 = vrsqrt.pop %v622
            %v624 = vmul.f32 %v621, %v623
            %v625 = vld [vmem:[%s3] sm:$0x3]
            %v626 = vmul.f32 %v615, %v624
            %v627 = vsub.f32 %v625, %v626
            %v628 = vlaneseq
            %vm629 = vcmp.ge.s32.totalorder %v628, 0
            %vm630 = vcmp.lt.s32.totalorder %v628, 256
            %vm631 = vmand %vm629, %vm630
            %632 = vst.msk [vmem:[#allocation5] ss:$2 sm:$0x3] %vm631, %v624
            %s633 = scalar_lea.vmem [#allocation5], 1
            %634 = vst.msk [vmem:[%s633] ss:$2 sm:$0x3] %vm631, %v627
          $region72: #{tpu_custom_call.1} parent=67 // pred_fallthru
            _
          %s635 = smul.u32 %s29, 8
          %s636 = smul.addr %s635, 8
          %s637 = scalar_lea.vmem [#allocation2], %s636
          %v638 = vld [vmem:[%s637] sm:$0xff]
          %v639 = vld [vmem:[%s637 + $0x8] sm:$0xff]
          %v640 = vld [vmem:[%s637 + $0x10] sm:$0xff]
          %v641 = vld [vmem:[%s637 + $0x18] sm:$0xff]
          %v642 = vld [vmem:[%s637 + $0x20] sm:$0xff]
          %v643 = vld [vmem:[%s637 + $0x28] sm:$0xff]
          %v644 = vld [vmem:[%s637 + $0x30] sm:$0xff]
          %v645 = vld [vmem:[%s637 + $0x38] sm:$0xff]
          %v646 = vld [vmem:[#allocation5] ss:$2 sm:$0x3]
          %v648 = vlaneseq
          %v649 = vshrl.u32 %v648, 7
          %v650 = vsub.s32 0, %v649
          %v651 = vrot.slane %v646, %v650
          %v652 = vlaneseq
          %v653 = vshrl.u32 %v652, 7
          %v654 = vsub.s32 1, %v653
          %v655 = vrot.slane %v646, %v654
          %v658 = vmul.f32 %v638, %v651
          %v659 = vmul.f32 %v639, %v655
          %v660 = vmul.f32 %v640, %v651
          %v661 = vmul.f32 %v641, %v655
          %v662 = vmul.f32 %v642, %v651
          %v663 = vmul.f32 %v643, %v655
          %v664 = vmul.f32 %v644, %v651
          %v665 = vmul.f32 %v645, %v655
          %s666 = scalar_lea.vmem [#allocation5], 1
          %v667 = vld [vmem:[%s666] ss:$2 sm:$0x3]
          %v669 = vlaneseq
          %v670 = vshrl.u32 %v669, 7
          %v671 = vsub.s32 0, %v670
          %v672 = vrot.slane %v667, %v671
          %v673 = vlaneseq
          %v674 = vshrl.u32 %v673, 7
          %v675 = vsub.s32 1, %v674
          %v676 = vrot.slane %v667, %v675
          %v679 = vadd.f32 %v658, %v672
          %v680 = vadd.f32 %v659, %v676
          %v681 = vadd.f32 %v660, %v672
          %v682 = vadd.f32 %v661, %v676
          %v683 = vadd.f32 %v662, %v672
          %v684 = vadd.f32 %v663, %v676
          %v685 = vadd.f32 %v664, %v672
          %v686 = vadd.f32 %v665, %v676
          %v687 = vmax.f32 %v679, 0.0
          %v688 = vmax.f32 %v680, 0.0
          %v689 = vmax.f32 %v681, 0.0
          %v690 = vmax.f32 %v682, 0.0
          %v691 = vmax.f32 %v683, 0.0
          %v692 = vmax.f32 %v684, 0.0
          %v693 = vmax.f32 %v685, 0.0
          %v694 = vmax.f32 %v686, 0.0
          %v695 = vpack.c.bf16 %v689, %v687
          %v696 = vpack.c.bf16 %v690, %v688
          %v697 = vpack.c.bf16 %v693, %v691
          %v698 = vpack.c.bf16 %v694, %v692
          %v699 = vld [vmem:[#allocation11] sm:$0xff]
          %v700 = vld [vmem:[#allocation11 + $0x8] sm:$0xff]
          %v701 = vld [vmem:[#allocation11 + $0x10] sm:$0xff]
          %v702 = vld [vmem:[#allocation11 + $0x18] sm:$0xff]
          %v703 = vld [vmem:[#allocation11 + $0x20] sm:$0xff]
          %v704 = vld [vmem:[#allocation11 + $0x28] sm:$0xff]
          %v705 = vld [vmem:[#allocation11 + $0x30] sm:$0xff]
          %v706 = vld [vmem:[#allocation11 + $0x38] sm:$0xff]
          %v707 = vld [vmem:[#allocation11 + $0x40] sm:$0xff]
          %v708 = vld [vmem:[#allocation11 + $0x48] sm:$0xff]
          %v709 = vld [vmem:[#allocation11 + $0x50] sm:$0xff]
          %v710 = vld [vmem:[#allocation11 + $0x58] sm:$0xff]
          %v711 = vld [vmem:[#allocation11 + $0x60] sm:$0xff]
          %v712 = vld [vmem:[#allocation11 + $0x68] sm:$0xff]
          %v713 = vld [vmem:[#allocation11 + $0x70] sm:$0xff]
          %v714 = vld [vmem:[#allocation11 + $0x78] sm:$0xff]
          %v715 = vld [vmem:[#allocation11 + $0x80] sm:$0xff]
          %v716 = vld [vmem:[#allocation11 + $0x88] sm:$0xff]
          %v717 = vld [vmem:[#allocation11 + $0x90] sm:$0xff]
          %v718 = vld [vmem:[#allocation11 + $0x98] sm:$0xff]
          %v719 = vld [vmem:[#allocation11 + $0xa0] sm:$0xff]
          %v720 = vld [vmem:[#allocation11 + $0xa8] sm:$0xff]
          %v721 = vld [vmem:[#allocation11 + $0xb0] sm:$0xff]
          %v722 = vld [vmem:[#allocation11 + $0xb8] sm:$0xff]
          %v723 = vld [vmem:[#allocation11 + $0xc0] sm:$0xff]
          %v724 = vld [vmem:[#allocation11 + $0xc8] sm:$0xff]
          %v725 = vld [vmem:[#allocation11 + $0xd0] sm:$0xff]
          %v726 = vld [vmem:[#allocation11 + $0xd8] sm:$0xff]
          %v727 = vld [vmem:[#allocation11 + $0xe0] sm:$0xff]
          %v728 = vld [vmem:[#allocation11 + $0xe8] sm:$0xff]
          %v729 = vld [vmem:[#allocation11 + $0xf0] sm:$0xff]
          %v730 = vld [vmem:[#allocation11 + $0xf8] sm:$0xff]
          %v731 = vpack.c.bf16 %v700, %v699
          %v732 = vpack.c.bf16 %v702, %v701
          %v733 = vpack.c.bf16 %v704, %v703
          %v734 = vpack.c.bf16 %v706, %v705
          %v735 = vpack.c.bf16 %v708, %v707
          %v736 = vpack.c.bf16 %v710, %v709
          %v737 = vpack.c.bf16 %v712, %v711
          %v738 = vpack.c.bf16 %v714, %v713
          %v739 = vpack.c.bf16 %v716, %v715
          %v740 = vpack.c.bf16 %v718, %v717
          %v741 = vpack.c.bf16 %v720, %v719
          %v742 = vpack.c.bf16 %v722, %v721
          %v743 = vpack.c.bf16 %v724, %v723
          %v744 = vpack.c.bf16 %v726, %v725
          %v745 = vpack.c.bf16 %v728, %v727
          %v746 = vpack.c.bf16 %v730, %v729
          %v747 = vld [vmem:[%s5] sm:$0x1]
          %v749 = vlaneseq
          %v750 = vshrl.u32 %v749, 7
          %v751 = vsub.s32 0, %v750
          %v752 = vrot.slane %v747, %v751
          %754 = vmatprep.subr.bf16.mxu0 0
          %755 = vmatpush1.bf16.msra.mxu0 %v731
          %756 = vmatprep.subr.bf16.mxu0 0
          %757 = vmatpush1.bf16.msra.mxu0 %v732
          %758 = vmatprep.subr.bf16.mxu0 0
          %759 = vmatpush1.bf16.msra.mxu0 %v733
          %760 = vmatprep.subr.bf16.mxu0 0
          %761 = vmatpush1.bf16.msra.mxu0 %v734
          %762 = vmatprep.subr.bf16.mxu0 0
          %763 = vmatpush1.bf16.msra.mxu0 %v735
          %764 = vmatprep.subr.bf16.mxu0 0
          %765 = vmatpush1.bf16.msra.mxu0 %v736
          %766 = vmatprep.subr.bf16.mxu0 0
          %767 = vmatpush1.bf16.msra.mxu0 %v737
          %768 = vmatprep.subr.bf16.mxu0 0
          %769 = vmatpush1.bf16.msra.mxu0 %v738
          %770 = vmatprep.subr.bf16.mxu0 0
          %771 = vmatpush1.bf16.msra.mxu0 %v739
          %772 = vmatprep.subr.bf16.mxu0 0
          %773 = vmatpush1.bf16.msra.mxu0 %v740
          %774 = vmatprep.subr.bf16.mxu0 0
          %775 = vmatpush1.bf16.msra.mxu0 %v741
          %776 = vmatprep.subr.bf16.mxu0 0
          %777 = vmatpush1.bf16.msra.mxu0 %v742
          %778 = vmatprep.subr.bf16.mxu0 0
          %779 = vmatpush1.bf16.msra.mxu0 %v743
          %780 = vmatprep.subr.bf16.mxu0 0
          %781 = vmatpush1.bf16.msra.mxu0 %v744
          %782 = vmatprep.subr.bf16.mxu0 0
          %783 = vmatpush1.bf16.msra.mxu0 %v745
          %784 = vmatprep.subr.bf16.mxu0 0
          %785 = vmatpush1.bf16.msra.mxu0 %v746
          %786 = vmatprep.mubr.bf16.mxu0 %v696
          %787 = vmatmul.mubr.bf16.gmra.mrb[0].mxu0 %v695
          %v788 = vpop.f32.mrb[0].mxu0
          %v789 = vadd.f32 %v752, %v788
          %v790 = vpop.f32.mrb[0].mxu0
          %v791 = vpop.f32.mrb[0].mxu0
          %v792 = vadd.f32 %v752, %v791
          %v793 = vpop.f32.mrb[0].mxu0
          %794 = vmatprep.mubr.bf16.mxu0 %v698
          %795 = vmatmul.mubr.bf16.gmra.mrb[0].mxu0 %v697
          %v796 = vpop.f32.mrb[0].mxu0
          %v797 = vadd.f32 %v752, %v796
          %v798 = vpop.f32.mrb[0].mxu0
          %v799 = vpop.f32.mrb[0].mxu0
          %v800 = vadd.f32 %v752, %v799
          %v801 = vpop.f32.mrb[0].mxu0
          %802 = vdwg.mxu0
          %803 = vst [vmem:[%s322] sm:$0xff] %v789
          %804 = vst [vmem:[%s322 + $0x8] sm:$0xff] %v792
          %805 = vst [vmem:[%s322 + $0x10] sm:$0xff] %v797
          %806 = vst [vmem:[%s322 + $0x18] sm:$0xff] %v800
        $region68: #{tpu_custom_call.1} parent=43 // pred_fallthru
          _
        %s807 = sand.u32 %s183, 1
        %s808 = scalar_lea.sflag [#allocation8], %s807
        %s809 = sand.u32 %s183, 1
        %s810 = smul.addr %s809, 32
        %s811 = scalar_lea.vmem [#allocation12], %s810
        // Predicated region
        $region73: #{tpu_custom_call.1} parent=43 // pred_check
          %p812 = pneg %p193
        $region74: #{tpu_custom_call.1} parent=43 // pred_check_branch
          %814 = sbr.rel (%p812) target = $region76
        $region75: #{tpu_custom_call.1} parent=43 // pred_region
          %s815 = smul.u32 %s29, %s28
          %s816 = smul.u32 4, %s815
          %s818 = ssub.s32 512, 512
          %819 = vsyncadd %s808, %s818
          %s820 = smul.addr %s816, 128
          %s821 = scalar_lea.hbm %s6, %s820
          %s822 = sshll.u32 %s811, 4
          %s823 = int_to_ptr.vmem [resolvable:$true] %s822
          %828 = dma.vmem_to_hbm [thread:$0]  %s823, 512, %s821, %s808, 128, 128, 8
        $region76: #{tpu_custom_call.1} parent=43 // pred_fallthru
          _
      $region44: #{tpu_custom_call.1} parent=5 // pred_fallthru
        _
      %p829 = scmp.le.s32.totalorder 2, %s19
      // Predicated region
      $region77: #{tpu_custom_call.1} parent=5 // pred_check
        %p830 = pneg %p829
      $region78: #{tpu_custom_call.1} parent=5 // pred_check_branch
        %832 = sbr.rel (%p830) target = $region80
      $region79: #{tpu_custom_call.1} parent=5 // pred_region
        %s833 = ssub.s32 %s19, 2
        // Predicated region
        $region81: #{tpu_custom_call.1} parent=79 // pred_check
          %p834 = pneg %p199
        $region82: #{tpu_custom_call.1} parent=79 // pred_check_branch
          %836 = sbr.rel (%p834) target = $region84
        $region83: #{tpu_custom_call.1} parent=79 // pred_region
          %s837 = sand.u32 %s184, 1
          %s838 = scalar_lea.sflag [#allocation8], %s837
          %s839 = sand.u32 %s184, 1
          %s840 = smul.addr %s839, 32
          %s841 = scalar_lea.vmem [#allocation12], %s840
          %842 = dma.done %s838, 512
        $region84: #{tpu_custom_call.1} parent=79 // pred_fallthru
          _
      $region80: #{tpu_custom_call.1} parent=5 // pred_fallthru
        _
    $region6: #{tpu_custom_call.1} parent=1 // loop_footer
      %s23 = sadd.s32 1, %s19
    $region7: #{tpu_custom_call.1} parent=1 // loop_footer_branch
      %18 = sbr.rel target = $region3
    $region8: #{tpu_custom_call.1} parent=1 // loop_exit
      _
    %843 = vsyncpa [#allocation7], 1
    %s844 = scalar_lea.sflag [#allocation7], 1
    %845 = vsyncpa %s844, 1
    %846 = vsyncpa [#allocation10], 1
    %847 = vsyncpa [#allocation8], 1
    %s848 = scalar_lea.sflag [#allocation8], 1
    %849 = vsyncpa %s848, 1

</llo_original>
